<compile_context>
chip_gen: v7x
topology: tpu7x:2x2x1
jax: 0.10.0
libtpu: 0.0.40
codegen_flags: <defaults>
</compile_context>

<pallas_src>
import jax
import jax.numpy as jnp
from jax.experimental import pallas as pl
from jax.experimental.pallas import tpu as pltpu


_VMEM_LIMIT = 32 * 1024 * 1024   # safe on v5e/v6e/v7x; tiles below use ~3 MiB


def _ceil_to(x, m):
    return ((x + m - 1) // m) * m


def _pad2(x, rows, cols):
    return jnp.pad(x, ((0, rows - x.shape[0]), (0, cols - x.shape[1])))


# --------------------------------------------------------------------------
# Kernels
# --------------------------------------------------------------------------

def feat_proj_kernel(h_ref, w1_ref, hw1_ref):
    # HW1 = H @ W1   (computed exactly once, not per A tile)
    hw1_ref[...] = jnp.dot(
        h_ref[...], w1_ref[...], preferred_element_type=jnp.float32
    ).astype(hw1_ref.dtype)


def layer1_kernel(a_ref, hw1_ref, b1_ref, wf_ref, z2_ref, acc_ref):
    # Z2 = relu(A @ HW1 + b1) @ Wf      (contraction over A columns = grid axis 1)
    k = pl.program_id(1)

    @pl.when(k == 0)
    def _init():
        acc_ref[...] = jnp.zeros_like(acc_ref)

    acc_ref[...] += jnp.dot(a_ref[...], hw1_ref[...],
                            preferred_element_type=jnp.float32)

    @pl.when(k == pl.num_programs(1) - 1)
    def _finalize():
        h1 = jnp.maximum(acc_ref[...] + b1_ref[...], 0.0)
        z2_ref[...] = jnp.dot(h1.astype(jnp.bfloat16), wf_ref[...],
                              preferred_element_type=jnp.float32
                              ).astype(z2_ref.dtype)


def layer2_kernel(a_ref, z2_ref, bf_ref, out_ref, acc_ref):
    # OUT = A @ Z2 + bf
    k = pl.program_id(1)

    @pl.when(k == 0)
    def _init():
        acc_ref[...] = jnp.zeros_like(acc_ref)

    acc_ref[...] += jnp.dot(a_ref[...], z2_ref[...],
                            preferred_element_type=jnp.float32)

    @pl.when(k == pl.num_programs(1) - 1)
    def _finalize():
        out_ref[...] = acc_ref[...] + bf_ref[...]


# --------------------------------------------------------------------------
# Wrapper
# --------------------------------------------------------------------------

def gcn_forward(a_hat, h, w1, b1, w2, b2, wp_t, bp, *, tile=512):
    """out = (A_hat @ (relu(A_hat @ (h@W1) + b1) @ W2) + b2) @ Wp^T + bp."""
    N, in_size = h.shape
    gc_hidden = w1.shape[1]
    out_size = wp_t.shape[1]
    f32, bf16 = jnp.float32, jnp.bfloat16

    # Fold the predict Linear into GraphConv2 (exact: no nonlinearity between).
    wf = jnp.dot(w2, wp_t)               # (gc_hidden, out_size)
    bfold = jnp.dot(b2, wp_t) + bp       # (1, out_size)

    # Lane-dense padded output width (multiple of 128).
    outp = _ceil_to(max(out_size, 128), 128)

    # Node-dimension tiling. Pad N so the tile divides evenly; padded A rows /
    # columns are zero, so padded nodes contribute nothing to the contraction.
    t = tile if N >= tile else _ceil_to(N, 128)
    n_pad = _ceil_to(N, t)
    nm = n_pad // t
    nk = n_pad // t

    # bf16 halves HBM bytes for the dominant A stream; accumulate in f32 on MXU.
    a_p = _pad2(a_hat, n_pad, n_pad).astype(bf16)
    h_p = _pad2(h, n_pad, in_size).astype(bf16)
    w1_b = w1.astype(bf16)
    b1_f = b1.astype(f32)
    wf_p = _pad2(wf, gc_hidden, outp).astype(bf16)
    bf_p = _pad2(bfold, 1, outp).astype(f32)

    # --- stage 0: HW1 = H @ W1 (computed once) -----------------------------
    hw1 = pl.pallas_call(
        feat_proj_kernel,
        out_shape=jax.ShapeDtypeStruct((n_pad, gc_hidden), bf16),
        grid_spec=pltpu.PrefetchScalarGridSpec(
            num_scalar_prefetch=0,
            grid=(nm,),
            in_specs=[pl.BlockSpec((t, in_size), lambda i: (i, 0)),
                      pl.BlockSpec((in_size, gc_hidden), lambda i: (0, 0))],
            out_specs=pl.BlockSpec((t, gc_hidden), lambda i: (i, 0))),
        compiler_params=pltpu.CompilerParams(
            dimension_semantics=("parallel",),
            vmem_limit_bytes=_VMEM_LIMIT),
        cost_estimate=pl.CostEstimate(
            flops=2 * n_pad * in_size * gc_hidden,
            transcendentals=0,
            bytes_accessed=2 * n_pad * (in_size + gc_hidden)),
    )(h_p, w1_b)

    # --- stage 1: Z2 = relu(A @ HW1 + b1) @ Wf ------------------------------
    z2 = pl.pallas_call(
        layer1_kernel,
        out_shape=jax.ShapeDtypeStruct((n_pad, outp), bf16),
        grid_spec=pltpu.PrefetchScalarGridSpec(
            num_scalar_prefetch=0,
            grid=(nm, nk),
            in_specs=[pl.BlockSpec((t, t), lambda i, k: (i, k)),
                      pl.BlockSpec((t, gc_hidden), lambda i, k: (k, 0)),
                      pl.BlockSpec((1, gc_hidden), lambda i, k: (0, 0)),
                      pl.BlockSpec((gc_hidden, outp), lambda i, k: (0, 0))],
            out_specs=pl.BlockSpec((t, outp), lambda i, k: (i, 0)),
            scratch_shapes=[pltpu.VMEM((t, gc_hidden), jnp.float32)]),
        compiler_params=pltpu.CompilerParams(
            dimension_semantics=("parallel", "arbitrary"),
            vmem_limit_bytes=_VMEM_LIMIT),
        cost_estimate=pl.CostEstimate(
            flops=2 * n_pad * n_pad * gc_hidden + 2 * n_pad * gc_hidden * outp,
            transcendentals=0,
            bytes_accessed=2 * n_pad * n_pad + 2 * n_pad * gc_hidden
            + 2 * n_pad * outp),
    )(a_p, hw1, b1_f, wf_p)

    # --- stage 2: OUT = A @ Z2 + bf -----------------------------------------
    out_p = pl.pallas_call(
        layer2_kernel,
        out_shape=jax.ShapeDtypeStruct((n_pad, outp), f32),
        grid_spec=pltpu.PrefetchScalarGridSpec(
            num_scalar_prefetch=0,
            grid=(nm, nk),
            in_specs=[pl.BlockSpec((t, t), lambda i, k: (i, k)),
                      pl.BlockSpec((t, outp), lambda i, k: (k, 0)),
                      pl.BlockSpec((1, outp), lambda i, k: (0, 0))],
            out_specs=pl.BlockSpec((t, outp), lambda i, k: (i, 0)),
            scratch_shapes=[pltpu.VMEM((t, outp), jnp.float32)]),
        compiler_params=pltpu.CompilerParams(
            dimension_semantics=("parallel", "arbitrary"),
            vmem_limit_bytes=_VMEM_LIMIT),
        cost_estimate=pl.CostEstimate(
            flops=2 * n_pad * n_pad * outp,
            transcendentals=0,
            bytes_accessed=2 * n_pad * n_pad + 2 * n_pad * outp
            + 4 * n_pad * outp),
    )(a_p, z2, bf_p)

    return out_p[:N, :out_size]


# --------------------------------------------------------------------------
# Demo / correctness check
# --------------------------------------------------------------------------

if __name__ == "__main__":
    # Small shapes consistent with the module's constructor.
    N = 8                 # number of graph nodes
    IN_SIZE = 32          # in_size
    GC_HIDDEN = 16        # GCNLayer's internal hidden_size (hard-coded 16)
    HIDDEN_SIZE = 8       # GCN hidden_size (output of GCNLayer)
    OUT_SIZE = 4          # out_size of predict Linear
    # num_meta_paths / num_heads are unused by the forward pass.

    key = jax.random.PRNGKey(0)
    k_adj, k_h, k_w1, k_b1, k_w2, k_b2, k_wp, k_bp = jax.random.split(key, 8)

    # Graph: random symmetric adjacency with self-loops, normalized D^-1/2 A D^-1/2.
    adj_raw = (jax.random.uniform(k_adj, (N, N)) > 0.6).astype(jnp.float32)
    adj = jnp.maximum(adj_raw, adj_raw.T)
    adj = jnp.maximum(adj, jnp.eye(N, dtype=jnp.float32))
    deg = adj.sum(axis=1)
    d_inv_sqrt = 1.0 / jnp.sqrt(deg)
    a_hat = adj * d_inv_sqrt[:, None] * d_inv_sqrt[None, :]

    # Node features.
    h = jax.random.normal(k_h, (N, IN_SIZE), dtype=jnp.float32)

    # Deterministic parameter init (Glorot-like scaling).
    def glorot(k, shape):
        fan_in, fan_out = shape[0], shape[1]
        scale = jnp.sqrt(6.0 / (fan_in + fan_out))
        return jax.random.uniform(k, shape, jnp.float32, -scale, scale)

    w1 = glorot(k_w1, (IN_SIZE, GC_HIDDEN))
    b1 = 0.01 * jax.random.normal(k_b1, (1, GC_HIDDEN))
    w2 = glorot(k_w2, (GC_HIDDEN, HIDDEN_SIZE))
    b2 = 0.01 * jax.random.normal(k_b2, (1, HIDDEN_SIZE))
    # nn.Linear weight is (out, in); pre-transpose to (in, out) for row-major matmul.
    wp = glorot(k_wp, (OUT_SIZE, HIDDEN_SIZE))
    wp_t = wp.T
    bp = 0.01 * jax.random.normal(k_bp, (1, OUT_SIZE))

    out = gcn_forward(a_hat, h, w1, b1, w2, b2, wp_t, bp)
    out = jax.block_until_ready(out)
    assert out.shape == (N, OUT_SIZE)

    # Reference 1: mirror the kernel's bf16 quantization points (tight check).
    def _q(x):
        return x.astype(jnp.bfloat16).astype(jnp.float32)

    wf_q = _q(jnp.dot(w2, wp_t))
    bfold = jnp.dot(b2, wp_t) + bp
    hw1_r = _q(jnp.dot(_q(h), _q(w1)))
    h1_r = jnp.maximum(jnp.dot(_q(a_hat), hw1_r) + b1, 0.0)
    z2_r = _q(jnp.dot(_q(h1_r), wf_q))
    ref_q = jnp.dot(_q(a_hat), z2_r) + bfold
    assert jnp.allclose(out, ref_q, atol=2e-2, rtol=2e-2)

    # Reference 2: pure f32 math of the original module (loose, bf16 tolerance).
    h1_f = jnp.maximum(a_hat @ (h @ w1) + b1, 0.0)
    ref_f = (a_hat @ (h1_f @ w2) + b2) @ wp_t + bp
    assert jnp.allclose(out, ref_f, atol=1e-1, rtol=1e-1)

    print("KERNEL_OK")
</pallas_src>

<mosaic_0001>
module attributes {stable_mosaic.version = 11 : i64} {
  func.func @feat_proj_kernel(%arg0: i32, %arg1: memref<128x32xbf16, #tpu.memory_space<vmem>>, %arg2: memref<32x16xbf16, #tpu.memory_space<vmem>>, %arg3: memref<128x16xbf16, #tpu.memory_space<vmem>>) attributes {dimension_semantics = [#tpu.dimension_semantics<parallel>], iteration_bounds = array<i64: 1>, scalar_prefetch = 0 : i64, scratch_operands = 0 : i64, tpu.core_type = #tpu.core_type<tc>, window_params = [{transform_indices = @transform_0, window_bounds = array<i64: 128, 32>}, {pipeline_mode = #tpu.pipeline_mode<synchronous>, transform_indices = @transform_1, window_bounds = array<i64: 32, 16>}, {transform_indices = @transform_2, window_bounds = array<i64: 128, 16>}]} {
    %c0 = arith.constant 0 : index
    %c0_0 = arith.constant 0 : index
    %0 = vector.load %arg1[%c0, %c0_0] : memref<128x32xbf16, #tpu.memory_space<vmem>>, vector<128x32xbf16>
    %c0_1 = arith.constant 0 : index
    %c0_2 = arith.constant 0 : index
    %1 = vector.load %arg2[%c0_1, %c0_2] : memref<32x16xbf16, #tpu.memory_space<vmem>>, vector<32x16xbf16>
    %cst = arith.constant dense<0.000000e+00> : vector<128x16xf32>
    %2 = tpu.matmul %0, %1, %cst {dimension_numbers = #tpu.dot_dimension_numbers<[1], [0], [0], [1], [0, 0, 1, 1], [], []>} : vector<128x32xbf16>, vector<32x16xbf16>, vector<128x16xf32> -> vector<128x16xf32>
    %3 = arith.truncf %2 : vector<128x16xf32> to vector<128x16xbf16>
    %c0_3 = arith.constant 0 : index
    %c0_4 = arith.constant 0 : index
    %4 = vector.load %arg3[%c0_3, %c0_4] : memref<128x16xbf16, #tpu.memory_space<vmem>>, vector<128x16xbf16>
    tpu.vector_store %arg3[%c0_3, %c0_4], %3 {strides = array<i32>} : memref<128x16xbf16, #tpu.memory_space<vmem>>, vector<128x16xbf16>,
    return
  }
  func.func @transform_0(%arg0: i32) -> (i32, i32) {
    %c0_i32 = arith.constant 0 : i32
    %c0_i32_0 = arith.constant 0 : i32
    return %arg0, %c0_i32 : i32, i32
  }
  func.func @transform_1(%arg0: i32) -> (i32, i32) {
    %c0_i32 = arith.constant 0 : i32
    %c0_i32_0 = arith.constant 0 : i32
    %c0_i32_1 = arith.constant 0 : i32
    return %c0_i32, %c0_i32_0 : i32, i32
  }
  func.func @transform_2(%arg0: i32) -> (i32, i32) {
    %c0_i32 = arith.constant 0 : i32
    %c0_i32_0 = arith.constant 0 : i32
    return %arg0, %c0_i32 : i32, i32
  }
}

</mosaic_0001>

<llo_original>
// kernel: tpu_custom_call.1
$region0: #{tpu_custom_call.1}
  #allocation0 [shape = 'u32[]', space=smem, size = 0x4, offset = 0x4, fixed_abs, tag = 'smem constant byte address 0x4 - core index']
  #allocation1 [shape = 'u32[144,128]{1,0:T(1,128)}', space=vmem, size = 0x12000, scoped, tag = 'internal scratch']
  %s0 = inlined_call_operand.vmem [shape: bf16[128,32], index: 0, kind: input, shape index: {}]
  %s1 = inlined_call_operand.vmem [shape: bf16[32,16], index: 1, kind: input, shape index: {}]
  %s2 = inlined_call_operand.vmem [shape: bf16[128,16], index: 2, kind: output, shape index: {}]
  %s3 = sld [smem:[#allocation0]]
  $region18: #{tpu_custom_call.1} parent=0
    _
  %s5 = ssub.s32 1, %s3
  %s6 = scalar_select 0, %s5, %s3
  // Predicated region
  $region2: #{tpu_custom_call.1} parent=0 // pred_check
    _
  $region3: #{tpu_custom_call.1} parent=0 // pred_check_branch
    %8 = sbr.rel (0) target = $region5
  $region4: #{tpu_custom_call.1} parent=0 // pred_region
    _
  $region5: #{tpu_custom_call.1} parent=0 // pred_fallthru
    _
  // Predicated region
  $region6: #{tpu_custom_call.1} parent=0 // pred_check
    _
  $region7: #{tpu_custom_call.1} parent=0 // pred_check_branch
    %10 = sbr.rel (0) target = $region9
  $region8: #{tpu_custom_call.1} parent=0 // pred_region
    _
  $region9: #{tpu_custom_call.1} parent=0 // pred_fallthru
    _
  %v12 = vld [vmem:[%s0] sm:$0xf]
  %v13 = vld [vmem:[%s0 + $0x4] sm:$0xf]
  %v14 = vld [vmem:[%s0 + $0x8] sm:$0xf]
  %v15 = vld [vmem:[%s0 + $0xc] sm:$0xf]
  %v16 = vld [vmem:[%s0 + $0x10] sm:$0xf]
  %v17 = vld [vmem:[%s0 + $0x14] sm:$0xf]
  %v18 = vld [vmem:[%s0 + $0x18] sm:$0xf]
  %v19 = vld [vmem:[%s0 + $0x1c] sm:$0xf]
  %v20 = vld [vmem:[%s0 + $0x20] sm:$0xf]
  %v21 = vld [vmem:[%s0 + $0x24] sm:$0xf]
  %v22 = vld [vmem:[%s0 + $0x28] sm:$0xf]
  %v23 = vld [vmem:[%s0 + $0x2c] sm:$0xf]
  %v24 = vld [vmem:[%s0 + $0x30] sm:$0xf]
  %v25 = vld [vmem:[%s0 + $0x34] sm:$0xf]
  %v26 = vld [vmem:[%s0 + $0x38] sm:$0xf]
  %v27 = vld [vmem:[%s0 + $0x3c] sm:$0xf]
  %v28 = vld [vmem:[%s1] sm:$0xf]
  %v29 = vld [vmem:[%s1 + $0x4] sm:$0xf]
  %v30 = vld [vmem:[%s1 + $0x8] sm:$0xf]
  %v31 = vld [vmem:[%s1 + $0xc] sm:$0xf]
  %v48 = vunpack.c.l.b16 %v12
  %v49 = vunpack.c.l.b16 %v13
  %v50 = vunpack.c.l.b16 %v14
  %v51 = vunpack.c.l.b16 %v15
  %v52 = vunpack.c.l.b16 %v16
  %v53 = vunpack.c.l.b16 %v17
  %v54 = vunpack.c.l.b16 %v18
  %v55 = vunpack.c.l.b16 %v19
  %v56 = vunpack.c.l.b16 %v20
  %v57 = vunpack.c.l.b16 %v21
  %v58 = vunpack.c.l.b16 %v22
  %v59 = vunpack.c.l.b16 %v23
  %v60 = vunpack.c.l.b16 %v24
  %v61 = vunpack.c.l.b16 %v25
  %v62 = vunpack.c.l.b16 %v26
  %v63 = vunpack.c.l.b16 %v27
  %v64 = vpack.c.b16 %v49, %v48
  %v65 = vpack.c.b16 %v51, %v50
  %v66 = vpack.c.b16 %v53, %v52
  %v67 = vpack.c.b16 %v55, %v54
  %v68 = vpack.c.b16 %v57, %v56
  %v69 = vpack.c.b16 %v59, %v58
  %v70 = vpack.c.b16 %v61, %v60
  %v71 = vpack.c.b16 %v63, %v62
  %v76 = vunpack.c.l.b16 %v28
  %v77 = vunpack.c.l.b16 %v29
  %v78 = vunpack.c.l.b16 %v30
  %v79 = vunpack.c.l.b16 %v31
  %v80 = vpack.c.b16 %v77, %v76
  %v81 = vpack.c.b16 %v79, %v78
  %vm84 = vcmask 261120
  %v86 = vsel %vm84, %v64, 0
  %v89 = vsel %vm84, %v65, 0
  %v92 = vsel %vm84, %v66, 0
  %v95 = vsel %vm84, %v67, 0
  %v98 = vsel %vm84, %v68, 0
  %v101 = vsel %vm84, %v69, 0
  %v104 = vsel %vm84, %v70, 0
  %v107 = vsel %vm84, %v71, 0
  %109 = vmatprep.subr.bf16.mxu0 0
  %110 = vmatpush1.bf16.msra.mxu0 %v80
  %111 = vmatprep.subr.bf16.mxu0 0
  %112 = vmatpush1.bf16.msra.mxu0 %v81
  %113 = vmatprep.subr.bf16.mxu0 0
  %114 = vmatpush1.bf16.msra.mxu0 0
  %115 = vmatprep.subr.bf16.mxu0 0
  %116 = vmatpush1.bf16.msra.mxu0 0
  %117 = vmatprep.subr.bf16.mxu0 0
  %118 = vmatpush1.bf16.msra.mxu0 0
  %119 = vmatprep.subr.bf16.mxu0 0
  %120 = vmatpush1.bf16.msra.mxu0 0
  %121 = vmatprep.subr.bf16.mxu0 0
  %122 = vmatpush1.bf16.msra.mxu0 0
  %123 = vmatprep.subr.bf16.mxu0 0
  %124 = vmatpush1.bf16.msra.mxu0 0
  %125 = vmatprep.subr.bf16.mxu0 0
  %126 = vmatpush1.bf16.msra.mxu0 0
  %127 = vmatprep.subr.bf16.mxu0 0
  %128 = vmatpush1.bf16.msra.mxu0 0
  %129 = vmatprep.subr.bf16.mxu0 0
  %130 = vmatpush1.bf16.msra.mxu0 0
  %131 = vmatprep.subr.bf16.mxu0 0
  %132 = vmatpush1.bf16.msra.mxu0 0
  %133 = vmatprep.subr.bf16.mxu0 0
  %134 = vmatpush1.bf16.msra.mxu0 0
  %135 = vmatprep.subr.bf16.mxu0 0
  %136 = vmatpush1.bf16.msra.mxu0 0
  %137 = vmatprep.subr.bf16.mxu0 0
  %138 = vmatpush1.bf16.msra.mxu0 0
  %139 = vmatprep.subr.bf16.mxu0 0
  %140 = vmatpush1.bf16.msra.mxu0 0
  %141 = vmatprep.mubr.bf16.mxu0 0
  %142 = vmatmul.mubr.bf16.gmra.mrb[0].mxu0 %v86
  %v143 = vpop.f32.mrb[0].mxu0
  %v144 = vadd.f32 0.0, %v143
  %v145 = vpop.f32.mrb[0].mxu0
  %v146 = vpop.f32.mrb[0].mxu0
  %v147 = vadd.f32 0.0, %v146
  %v148 = vpop.f32.mrb[0].mxu0
  %149 = vmatprep.mubr.bf16.mxu0 0
  %150 = vmatmul.mubr.bf16.gmra.mrb[0].mxu0 %v89
  %v151 = vpop.f32.mrb[0].mxu0
  %v152 = vadd.f32 0.0, %v151
  %v153 = vpop.f32.mrb[0].mxu0
  %v154 = vpop.f32.mrb[0].mxu0
  %v155 = vadd.f32 0.0, %v154
  %v156 = vpop.f32.mrb[0].mxu0
  %157 = vmatprep.mubr.bf16.mxu0 0
  %158 = vmatmul.mubr.bf16.gmra.mrb[0].mxu0 %v92
  %v159 = vpop.f32.mrb[0].mxu0
  %v160 = vadd.f32 0.0, %v159
  %v161 = vpop.f32.mrb[0].mxu0
  %v162 = vpop.f32.mrb[0].mxu0
  %v163 = vadd.f32 0.0, %v162
  %v164 = vpop.f32.mrb[0].mxu0
  %165 = vmatprep.mubr.bf16.mxu0 0
  %166 = vmatmul.mubr.bf16.gmra.mrb[0].mxu0 %v95
  %v167 = vpop.f32.mrb[0].mxu0
  %v168 = vadd.f32 0.0, %v167
  %v169 = vpop.f32.mrb[0].mxu0
  %v170 = vpop.f32.mrb[0].mxu0
  %v171 = vadd.f32 0.0, %v170
  %v172 = vpop.f32.mrb[0].mxu0
  %173 = vmatprep.mubr.bf16.mxu0 0
  %174 = vmatmul.mubr.bf16.gmra.mrb[0].mxu0 %v98
  %v175 = vpop.f32.mrb[0].mxu0
  %v176 = vadd.f32 0.0, %v175
  %v177 = vpop.f32.mrb[0].mxu0
  %v178 = vpop.f32.mrb[0].mxu0
  %v179 = vadd.f32 0.0, %v178
  %v180 = vpop.f32.mrb[0].mxu0
  %181 = vmatprep.mubr.bf16.mxu0 0
  %182 = vmatmul.mubr.bf16.gmra.mrb[0].mxu0 %v101
  %v183 = vpop.f32.mrb[0].mxu0
  %v184 = vadd.f32 0.0, %v183
  %v185 = vpop.f32.mrb[0].mxu0
  %v186 = vpop.f32.mrb[0].mxu0
  %v187 = vadd.f32 0.0, %v186
  %v188 = vpop.f32.mrb[0].mxu0
  %189 = vmatprep.mubr.bf16.mxu0 0
  %190 = vmatmul.mubr.bf16.gmra.mrb[0].mxu0 %v104
  %v191 = vpop.f32.mrb[0].mxu0
  %v192 = vadd.f32 0.0, %v191
  %v193 = vpop.f32.mrb[0].mxu0
  %v194 = vpop.f32.mrb[0].mxu0
  %v195 = vadd.f32 0.0, %v194
  %v196 = vpop.f32.mrb[0].mxu0
  %197 = vmatprep.mubr.bf16.mxu0 0
  %198 = vmatmul.mubr.bf16.gmra.mrb[0].mxu0 %v107
  %v199 = vpop.f32.mrb[0].mxu0
  %v200 = vadd.f32 0.0, %v199
  %v201 = vpop.f32.mrb[0].mxu0
  %v202 = vpop.f32.mrb[0].mxu0
  %v203 = vadd.f32 0.0, %v202
  %v204 = vpop.f32.mrb[0].mxu0
  %205 = vdwg.mxu0
  %v206 = vpack.c.bf16 %v147, %v144
  %v207 = vpack.c.bf16 %v155, %v152
  %v208 = vpack.c.bf16 %v163, %v160
  %v209 = vpack.c.bf16 %v171, %v168
  %v210 = vpack.c.bf16 %v179, %v176
  %v211 = vpack.c.bf16 %v187, %v184
  %v212 = vpack.c.bf16 %v195, %v192
  %v213 = vpack.c.bf16 %v203, %v200
  %v222 = vunpack.c.l.b16 %v206
  %v223 = vunpack.c.h.b16 %v206
  %v224 = vunpack.c.l.b16 %v207
  %v225 = vunpack.c.h.b16 %v207
  %v226 = vunpack.c.l.b16 %v208
  %v227 = vunpack.c.h.b16 %v208
  %v228 = vunpack.c.l.b16 %v209
  %v229 = vunpack.c.h.b16 %v209
  %v230 = vunpack.c.l.b16 %v210
  %v231 = vunpack.c.h.b16 %v210
  %v232 = vunpack.c.l.b16 %v211
  %v233 = vunpack.c.h.b16 %v211
  %v234 = vunpack.c.l.b16 %v212
  %v235 = vunpack.c.h.b16 %v212
  %v236 = vunpack.c.l.b16 %v213
  %v237 = vunpack.c.h.b16 %v213
  %v238 = vpack.c.b16 %v222, %v222
  %v239 = vpack.c.b16 %v223, %v223
  %v240 = vpack.c.b16 %v224, %v224
  %v241 = vpack.c.b16 %v225, %v225
  %v242 = vpack.c.b16 %v226, %v226
  %v243 = vpack.c.b16 %v227, %v227
  %v244 = vpack.c.b16 %v228, %v228
  %v245 = vpack.c.b16 %v229, %v229
  %v246 = vpack.c.b16 %v230, %v230
  %v247 = vpack.c.b16 %v231, %v231
  %v248 = vpack.c.b16 %v232, %v232
  %v249 = vpack.c.b16 %v233, %v233
  %v250 = vpack.c.b16 %v234, %v234
  %v251 = vpack.c.b16 %v235, %v235
  %v252 = vpack.c.b16 %v236, %v236
  %v253 = vpack.c.b16 %v237, %v237
  %vm270 = vcmask 125952
  %271 = vst.msk [vmem:[%s2] sm:$0xf] %vm270, %v238
  %272 = vst.msk [vmem:[%s2 + $0x4] sm:$0xf] %vm270, %v239
  %273 = vst.msk [vmem:[%s2 + $0x8] sm:$0xf] %vm270, %v240
  %274 = vst.msk [vmem:[%s2 + $0xc] sm:$0xf] %vm270, %v241
  %275 = vst.msk [vmem:[%s2 + $0x10] sm:$0xf] %vm270, %v242
  %276 = vst.msk [vmem:[%s2 + $0x14] sm:$0xf] %vm270, %v243
  %277 = vst.msk [vmem:[%s2 + $0x18] sm:$0xf] %vm270, %v244
  %278 = vst.msk [vmem:[%s2 + $0x1c] sm:$0xf] %vm270, %v245
  %279 = vst.msk [vmem:[%s2 + $0x20] sm:$0xf] %vm270, %v246
  %280 = vst.msk [vmem:[%s2 + $0x24] sm:$0xf] %vm270, %v247
  %281 = vst.msk [vmem:[%s2 + $0x28] sm:$0xf] %vm270, %v248
  %282 = vst.msk [vmem:[%s2 + $0x2c] sm:$0xf] %vm270, %v249
  %283 = vst.msk [vmem:[%s2 + $0x30] sm:$0xf] %vm270, %v250
  %284 = vst.msk [vmem:[%s2 + $0x34] sm:$0xf] %vm270, %v251
  %285 = vst.msk [vmem:[%s2 + $0x38] sm:$0xf] %vm270, %v252
  %286 = vst.msk [vmem:[%s2 + $0x3c] sm:$0xf] %vm270, %v253
  // Predicated region
  $region10: #{tpu_custom_call.1} parent=0 // pred_check
    _
  $region11: #{tpu_custom_call.1} parent=0 // pred_check_branch
    %288 = sbr.rel (0) target = $region13
  $region12: #{tpu_custom_call.1} parent=0 // pred_region
    _
  $region13: #{tpu_custom_call.1} parent=0 // pred_fallthru
    _
  // Predicated region
  $region14: #{tpu_custom_call.1} parent=0 // pred_check
    _
  $region15: #{tpu_custom_call.1} parent=0 // pred_check_branch
    %290 = sbr.rel (0) target = $region17
  $region16: #{tpu_custom_call.1} parent=0 // pred_region
    _
  $region17: #{tpu_custom_call.1} parent=0 // pred_fallthru
    _

</llo_original>
